<compile_context>
chip_gen: v7x
topology: tpu7x:2x2x1
jax: 0.10.0
libtpu: 0.0.40
codegen_flags: <defaults>
</compile_context>

<pallas_src>
import functools

import jax
import jax.numpy as jnp
from jax import lax
from jax.experimental import pallas as pl
from jax.experimental.pallas import tpu as pltpu


def _lstm_recurrence_kernel(gx_ref, w_hh_ref, h0_ref, c0_ref,
                            y_ref, cn_ref, *, hidden_size, seq_len):
    """Full T-step LSTM recurrence in ONE kernel invocation.

    gx_ref : (T, B, 4H)  precomputed input projection x@W_ih^T + (b_ih + b_hh)
    w_hh_ref: (H, 4H)    recurrent weight (already transposed)
    h0_ref, c0_ref: (B, H) initial state
    y_ref  : (T, B, H)   all hidden states (single writeback at kernel end)
    cn_ref : (B, H)      final cell state (h_n == y[-1], sliced in wrapper)
    """
    H = hidden_size
    w_hh = w_hh_ref[...]                      # keep resident across all steps

    def step(t, carry):
        h_prev, c_prev = carry
        # Per-step critical path: one (B,H)@(H,4H) MXU call + VPU/EUP elementwise.
        gates = gx_ref[t] + jnp.dot(h_prev, w_hh,
                                    preferred_element_type=jnp.float32)
        i_g = jax.nn.sigmoid(gates[:, 0 * H:1 * H])
        f_g = jax.nn.sigmoid(gates[:, 1 * H:2 * H])
        g_g = jnp.tanh(gates[:, 2 * H:3 * H])
        o_g = jax.nn.sigmoid(gates[:, 3 * H:4 * H])
        c_new = f_g * c_prev + i_g * g_g
        h_new = o_g * jnp.tanh(c_new)
        y_ref[t] = h_new.astype(y_ref.dtype)  # VMEM store; DMA'd out once
        return (h_new, c_new)

    _, c_last = lax.fori_loop(0, seq_len, step,
                              (h0_ref[...], c0_ref[...]),
                              unroll=True)    # short fixed trip count
    cn_ref[...] = c_last.astype(cn_ref.dtype)


def encoder_forward(x, hidden, params):
    """Pallas implementation of Encoder.forward (single-layer nn.LSTM).

    x:      (T, B, I) float32
    hidden: (h0, c0), each (1, B, H) float32
    params: dict with w_ih (4H, I), w_hh (4H, H), b_ih (4H,), b_hh (4H,)
    Returns (y, (h_n, c_n)) with PyTorch shapes.
    """
    h0, c0 = hidden
    T, B, I = x.shape
    H = h0.shape[-1]

    w_ih_t = jnp.transpose(params["w_ih"]).astype(jnp.float32)   # (I, 4H)
    w_hh_t = jnp.transpose(params["w_hh"]).astype(jnp.float32)   # (H, 4H)
    bias = (params["b_ih"] + params["b_hh"]).astype(jnp.float32)  # (4H,)

    # Hoisted input projection: one big (T*B, I) @ (I, 4H) matmul (plain XLA)
    # instead of T tiny MXU calls on the sequential path.
    gates_x = (x.reshape(T * B, I).astype(jnp.float32) @ w_ih_t
               + bias).reshape(T, B, 4 * H)
    # TODO(synk): at non-toy B/H, cast gates_x / w_hh_t to bfloat16 (keep f32
    # accumulation + f32 gate math) for v6e/v7x MXU throughput, and tile W_hh
    # along 4H if H grows large enough to pressure v7x's 64 MiB VMEM.

    kernel = functools.partial(_lstm_recurrence_kernel,
                               hidden_size=H, seq_len=T)

    grid_spec = pltpu.PrefetchScalarGridSpec(
        num_scalar_prefetch=0,
        grid=(1,),  # whole recurrence in one invocation: no per-step overhead
        in_specs=[
            pl.BlockSpec((T, B, 4 * H), lambda i: (0, 0, 0)),   # gates_x
            pl.BlockSpec((H, 4 * H), lambda i: (0, 0)),         # W_hh^T
            pl.BlockSpec((B, H), lambda i: (0, 0)),             # h0
            pl.BlockSpec((B, H), lambda i: (0, 0)),             # c0
        ],
        out_specs=[
            pl.BlockSpec((T, B, H), lambda i: (0, 0, 0)),       # y (full slab)
            pl.BlockSpec((B, H), lambda i: (0, 0)),             # c_n
        ],
    )

    y, c_n = pl.pallas_call(
        kernel,
        out_shape=(
            jax.ShapeDtypeStruct((T, B, H), jnp.float32),
            jax.ShapeDtypeStruct((B, H), jnp.float32),
        ),
        grid_spec=grid_spec,
        compiler_params=pltpu.CompilerParams(
            dimension_semantics=("arbitrary",),   # recurrence => sequential
            vmem_limit_bytes=32 * 1024 * 1024,
        ),
    )(gates_x, w_hh_t, h0[0], c0[0])

    h_n = y[-1:]                     # (1, B, H) — last hidden state == h_n
    return y, (h_n, c_n[None])


def encoder_forward_ref(x, hidden, params):
    """Pure-JAX reference of PyTorch single-layer LSTM semantics."""
    h0, c0 = hidden
    H = h0.shape[-1]
    w_ih = params["w_ih"]
    w_hh = params["w_hh"]
    b = params["b_ih"] + params["b_hh"]

    def step(carry, x_t):
        h, c = carry
        gates = x_t @ w_ih.T + h @ w_hh.T + b
        i = jax.nn.sigmoid(gates[:, 0 * H:1 * H])
        f = jax.nn.sigmoid(gates[:, 1 * H:2 * H])
        g = jnp.tanh(gates[:, 2 * H:3 * H])
        o = jax.nn.sigmoid(gates[:, 3 * H:4 * H])
        c_new = f * c + i * g
        h_new = o * jnp.tanh(c_new)
        return (h_new, c_new), h_new

    (h_n, c_n), ys = lax.scan(step, (h0[0], c0[0]), x)
    return ys, (h_n[None], c_n[None])


def init_params(key, input_size, hidden_size):
    """Deterministic init mimicking PyTorch nn.LSTM (uniform(-k, k), k=1/sqrt(H))."""
    k = 1.0 / jnp.sqrt(hidden_size)
    k1, k2, k3, k4 = jax.random.split(key, 4)
    return {
        "w_ih": jax.random.uniform(k1, (4 * hidden_size, input_size),
                                   jnp.float32, -k, k),
        "w_hh": jax.random.uniform(k2, (4 * hidden_size, hidden_size),
                                   jnp.float32, -k, k),
        "b_ih": jax.random.uniform(k3, (4 * hidden_size,), jnp.float32, -k, k),
        "b_hh": jax.random.uniform(k4, (4 * hidden_size,), jnp.float32, -k, k),
    }


if __name__ == "__main__":
    SEQ, BATCH, INPUT, HIDDEN = 8, 2, 4, 32

    root = jax.random.PRNGKey(0)
    kx, kp = jax.random.split(root)
    x = jax.random.normal(kx, (SEQ, BATCH, INPUT), jnp.float32)
    params = init_params(kp, INPUT, HIDDEN)

    # Encoder.init_hidden(batch_size): zeros of (1, B, H)
    h0 = jnp.zeros((1, BATCH, HIDDEN), jnp.float32)
    c0 = jnp.zeros((1, BATCH, HIDDEN), jnp.float32)

    y, (h_n, c_n) = encoder_forward(x, (h0, c0), params)
    jax.block_until_ready((y, h_n, c_n))

    y_ref, (h_ref, c_ref) = encoder_forward_ref(x, (h0, c0), params)
    assert y.shape == (SEQ, BATCH, HIDDEN)
    assert h_n.shape == (1, BATCH, HIDDEN) and c_n.shape == (1, BATCH, HIDDEN)
    assert jnp.allclose(y, y_ref, atol=1e-5, rtol=1e-5)
    assert jnp.allclose(h_n, h_ref, atol=1e-5, rtol=1e-5)
    assert jnp.allclose(c_n, c_ref, atol=1e-5, rtol=1e-5)

    print("KERNEL_OK")
</pallas_src>

<mosaic_0001>
module attributes {stable_mosaic.version = 11 : i64} {
  func.func @_lstm_recurrence_kernel(%arg0: i32, %arg1: memref<8x2x128xf32, #tpu.memory_space<vmem>>, %arg2: memref<32x128xf32, #tpu.memory_space<vmem>>, %arg3: memref<2x32xf32, #tpu.memory_space<vmem>>, %arg4: memref<2x32xf32, #tpu.memory_space<vmem>>, %arg5: memref<8x2x32xf32, #tpu.memory_space<vmem>>, %arg6: memref<2x32xf32, #tpu.memory_space<vmem>>) attributes {dimension_semantics = [#tpu.dimension_semantics<arbitrary>], iteration_bounds = array<i64: 1>, scalar_prefetch = 0 : i64, scratch_operands = 0 : i64, tpu.core_type = #tpu.core_type<tc>, window_params = [{pipeline_mode = #tpu.pipeline_mode<synchronous>, transform_indices = @transform_0, window_bounds = array<i64: 8, 2, 128>}, {pipeline_mode = #tpu.pipeline_mode<synchronous>, transform_indices = @transform_1, window_bounds = array<i64: 32, 128>}, {pipeline_mode = #tpu.pipeline_mode<synchronous>, transform_indices = @transform_2, window_bounds = array<i64: 2, 32>}, {pipeline_mode = #tpu.pipeline_mode<synchronous>, transform_indices = @transform_3, window_bounds = array<i64: 2, 32>}, {pipeline_mode = #tpu.pipeline_mode<synchronous>, transform_indices = @transform_4, window_bounds = array<i64: 8, 2, 32>}, {pipeline_mode = #tpu.pipeline_mode<synchronous>, transform_indices = @transform_5, window_bounds = array<i64: 2, 32>}]} {
    %c0 = arith.constant 0 : index
    %c0_0 = arith.constant 0 : index
    %0 = vector.load %arg2[%c0, %c0_0] : memref<32x128xf32, #tpu.memory_space<vmem>>, vector<32x128xf32>
    %c0_1 = arith.constant 0 : index
    %c0_2 = arith.constant 0 : index
    %1 = vector.load %arg3[%c0_1, %c0_2] : memref<2x32xf32, #tpu.memory_space<vmem>>, vector<2x32xf32>
    %c0_3 = arith.constant 0 : index
    %c0_4 = arith.constant 0 : index
    %2 = vector.load %arg4[%c0_3, %c0_4] : memref<2x32xf32, #tpu.memory_space<vmem>>, vector<2x32xf32>
    %c0_i32 = arith.constant 0 : i32
    %3 = arith.index_cast %c0_i32 : i32 to index
    %c0_5 = arith.constant 0 : index
    %c0_6 = arith.constant 0 : index
    %4 = vector.load %arg1[%3, %c0_5, %c0_6] : memref<8x2x128xf32, #tpu.memory_space<vmem>>, vector<1x2x128xf32>
    %5 = vector.shape_cast %4 : vector<1x2x128xf32> to vector<2x128xf32>
    %cst = arith.constant dense<0.000000e+00> : vector<2x128xf32>
    %6 = tpu.matmul %1, %0, %cst {dimension_numbers = #tpu.dot_dimension_numbers<[1], [0], [0], [1], [0, 0, 1, 1], [], []>} : vector<2x32xf32>, vector<32x128xf32>, vector<2x128xf32> -> vector<2x128xf32>
    %7 = arith.addf %5, %6 : vector<2x128xf32>
    %8 = vector.extract_strided_slice %7 {offsets = [0, 0], sizes = [2, 32], strides = [1, 1]} : vector<2x128xf32> to vector<2x32xf32>
    %9 = arith.negf %8 : vector<2x32xf32>
    %10 = math.exp %9 : vector<2x32xf32>
    %cst_7 = arith.constant 1.000000e+00 : f32
    %11 = vector.broadcast %cst_7 : f32 to vector<2x32xf32>
    %12 = arith.addf %11, %10 : vector<2x32xf32>
    %13 = arith.divf %11, %12 : vector<2x32xf32>
    %14 = vector.extract_strided_slice %7 {offsets = [0, 32], sizes = [2, 32], strides = [1, 1]} : vector<2x128xf32> to vector<2x32xf32>
    %15 = arith.negf %14 : vector<2x32xf32>
    %16 = math.exp %15 : vector<2x32xf32>
    %cst_8 = arith.constant 1.000000e+00 : f32
    %17 = vector.broadcast %cst_8 : f32 to vector<2x32xf32>
    %18 = arith.addf %17, %16 : vector<2x32xf32>
    %19 = arith.divf %17, %18 : vector<2x32xf32>
    %20 = vector.extract_strided_slice %7 {offsets = [0, 64], sizes = [2, 32], strides = [1, 1]} : vector<2x128xf32> to vector<2x32xf32>
    %21 = math.tanh %20 : vector<2x32xf32>
    %22 = vector.extract_strided_slice %7 {offsets = [0, 96], sizes = [2, 32], strides = [1, 1]} : vector<2x128xf32> to vector<2x32xf32>
    %23 = arith.negf %22 : vector<2x32xf32>
    %24 = math.exp %23 : vector<2x32xf32>
    %cst_9 = arith.constant 1.000000e+00 : f32
    %25 = vector.broadcast %cst_9 : f32 to vector<2x32xf32>
    %26 = arith.addf %25, %24 : vector<2x32xf32>
    %27 = arith.divf %25, %26 : vector<2x32xf32>
    %28 = arith.mulf %19, %2 : vector<2x32xf32>
    %29 = arith.mulf %13, %21 : vector<2x32xf32>
    %30 = arith.addf %28, %29 : vector<2x32xf32>
    %31 = math.tanh %30 : vector<2x32xf32>
    %32 = arith.mulf %27, %31 : vector<2x32xf32>
    %33 = arith.index_cast %c0_i32 : i32 to index
    %c0_10 = arith.constant 0 : index
    %c0_11 = arith.constant 0 : index
    %34 = vector.load %arg5[%33, %c0_10, %c0_11] : memref<8x2x32xf32, #tpu.memory_space<vmem>>, vector<1x2x32xf32>
    %35 = vector.shape_cast %34 : vector<1x2x32xf32> to vector<2x32xf32>
    %36 = vector.shape_cast %32 : vector<2x32xf32> to vector<1x2x32xf32>
    tpu.vector_store %arg5[%33, %c0_10, %c0_11], %36 {strides = array<i32>} : memref<8x2x32xf32, #tpu.memory_space<vmem>>, vector<1x2x32xf32>,
    %c1_i32 = arith.constant 1 : i32
    %37 = arith.index_cast %c1_i32 : i32 to index
    %c0_12 = arith.constant 0 : index
    %c0_13 = arith.constant 0 : index
    %38 = vector.load %arg1[%37, %c0_12, %c0_13] : memref<8x2x128xf32, #tpu.memory_space<vmem>>, vector<1x2x128xf32>
    %39 = vector.shape_cast %38 : vector<1x2x128xf32> to vector<2x128xf32>
    %cst_14 = arith.constant dense<0.000000e+00> : vector<2x128xf32>
    %40 = tpu.matmul %32, %0, %cst_14 {dimension_numbers = #tpu.dot_dimension_numbers<[1], [0], [0], [1], [0, 0, 1, 1], [], []>} : vector<2x32xf32>, vector<32x128xf32>, vector<2x128xf32> -> vector<2x128xf32>
    %41 = arith.addf %39, %40 : vector<2x128xf32>
    %42 = vector.extract_strided_slice %41 {offsets = [0, 0], sizes = [2, 32], strides = [1, 1]} : vector<2x128xf32> to vector<2x32xf32>
    %43 = arith.negf %42 : vector<2x32xf32>
    %44 = math.exp %43 : vector<2x32xf32>
    %cst_15 = arith.constant 1.000000e+00 : f32
    %45 = vector.broadcast %cst_15 : f32 to vector<2x32xf32>
    %46 = arith.addf %45, %44 : vector<2x32xf32>
    %47 = arith.divf %45, %46 : vector<2x32xf32>
    %48 = vector.extract_strided_slice %41 {offsets = [0, 32], sizes = [2, 32], strides = [1, 1]} : vector<2x128xf32> to vector<2x32xf32>
    %49 = arith.negf %48 : vector<2x32xf32>
    %50 = math.exp %49 : vector<2x32xf32>
    %cst_16 = arith.constant 1.000000e+00 : f32
    %51 = vector.broadcast %cst_16 : f32 to vector<2x32xf32>
    %52 = arith.addf %51, %50 : vector<2x32xf32>
    %53 = arith.divf %51, %52 : vector<2x32xf32>
    %54 = vector.extract_strided_slice %41 {offsets = [0, 64], sizes = [2, 32], strides = [1, 1]} : vector<2x128xf32> to vector<2x32xf32>
    %55 = math.tanh %54 : vector<2x32xf32>
    %56 = vector.extract_strided_slice %41 {offsets = [0, 96], sizes = [2, 32], strides = [1, 1]} : vector<2x128xf32> to vector<2x32xf32>
    %57 = arith.negf %56 : vector<2x32xf32>
    %58 = math.exp %57 : vector<2x32xf32>
    %cst_17 = arith.constant 1.000000e+00 : f32
    %59 = vector.broadcast %cst_17 : f32 to vector<2x32xf32>
    %60 = arith.addf %59, %58 : vector<2x32xf32>
    %61 = arith.divf %59, %60 : vector<2x32xf32>
    %62 = arith.mulf %53, %30 : vector<2x32xf32>
    %63 = arith.mulf %47, %55 : vector<2x32xf32>
    %64 = arith.addf %62, %63 : vector<2x32xf32>
    %65 = math.tanh %64 : vector<2x32xf32>
    %66 = arith.mulf %61, %65 : vector<2x32xf32>
    %67 = arith.index_cast %c1_i32 : i32 to index
    %c0_18 = arith.constant 0 : index
    %c0_19 = arith.constant 0 : index
    %68 = vector.load %arg5[%67, %c0_18, %c0_19] : memref<8x2x32xf32, #tpu.memory_space<vmem>>, vector<1x2x32xf32>
    %69 = vector.shape_cast %68 : vector<1x2x32xf32> to vector<2x32xf32>
    %70 = vector.shape_cast %66 : vector<2x32xf32> to vector<1x2x32xf32>
    tpu.vector_store %arg5[%67, %c0_18, %c0_19], %70 {strides = array<i32>} : memref<8x2x32xf32, #tpu.memory_space<vmem>>, vector<1x2x32xf32>,
    %c2_i32 = arith.constant 2 : i32
    %71 = arith.index_cast %c2_i32 : i32 to index
    %c0_20 = arith.constant 0 : index
    %c0_21 = arith.constant 0 : index
    %72 = vector.load %arg1[%71, %c0_20, %c0_21] : memref<8x2x128xf32, #tpu.memory_space<vmem>>, vector<1x2x128xf32>
    %73 = vector.shape_cast %72 : vector<1x2x128xf32> to vector<2x128xf32>
    %cst_22 = arith.constant dense<0.000000e+00> : vector<2x128xf32>
    %74 = tpu.matmul %66, %0, %cst_22 {dimension_numbers = #tpu.dot_dimension_numbers<[1], [0], [0], [1], [0, 0, 1, 1], [], []>} : vector<2x32xf32>, vector<32x128xf32>, vector<2x128xf32> -> vector<2x128xf32>
    %75 = arith.addf %73, %74 : vector<2x128xf32>
    %76 = vector.extract_strided_slice %75 {offsets = [0, 0], sizes = [2, 32], strides = [1, 1]} : vector<2x128xf32> to vector<2x32xf32>
    %77 = arith.negf %76 : vector<2x32xf32>
    %78 = math.exp %77 : vector<2x32xf32>
    %cst_23 = arith.constant 1.000000e+00 : f32
    %79 = vector.broadcast %cst_23 : f32 to vector<2x32xf32>
    %80 = arith.addf %79, %78 : vector<2x32xf32>
    %81 = arith.divf %79, %80 : vector<2x32xf32>
    %82 = vector.extract_strided_slice %75 {offsets = [0, 32], sizes = [2, 32], strides = [1, 1]} : vector<2x128xf32> to vector<2x32xf32>
    %83 = arith.negf %82 : vector<2x32xf32>
    %84 = math.exp %83 : vector<2x32xf32>
    %cst_24 = arith.constant 1.000000e+00 : f32
    %85 = vector.broadcast %cst_24 : f32 to vector<2x32xf32>
    %86 = arith.addf %85, %84 : vector<2x32xf32>
    %87 = arith.divf %85, %86 : vector<2x32xf32>
    %88 = vector.extract_strided_slice %75 {offsets = [0, 64], sizes = [2, 32], strides = [1, 1]} : vector<2x128xf32> to vector<2x32xf32>
    %89 = math.tanh %88 : vector<2x32xf32>
    %90 = vector.extract_strided_slice %75 {offsets = [0, 96], sizes = [2, 32], strides = [1, 1]} : vector<2x128xf32> to vector<2x32xf32>
    %91 = arith.negf %90 : vector<2x32xf32>
    %92 = math.exp %91 : vector<2x32xf32>
    %cst_25 = arith.constant 1.000000e+00 : f32
    %93 = vector.broadcast %cst_25 : f32 to vector<2x32xf32>
    %94 = arith.addf %93, %92 : vector<2x32xf32>
    %95 = arith.divf %93, %94 : vector<2x32xf32>
    %96 = arith.mulf %87, %64 : vector<2x32xf32>
    %97 = arith.mulf %81, %89 : vector<2x32xf32>
    %98 = arith.addf %96, %97 : vector<2x32xf32>
    %99 = math.tanh %98 : vector<2x32xf32>
    %100 = arith.mulf %95, %99 : vector<2x32xf32>
    %101 = arith.index_cast %c2_i32 : i32 to index
    %c0_26 = arith.constant 0 : index
    %c0_27 = arith.constant 0 : index
    %102 = vector.load %arg5[%101, %c0_26, %c0_27] : memref<8x2x32xf32, #tpu.memory_space<vmem>>, vector<1x2x32xf32>
    %103 = vector.shape_cast %102 : vector<1x2x32xf32> to vector<2x32xf32>
    %104 = vector.shape_cast %100 : vector<2x32xf32> to vector<1x2x32xf32>
    tpu.vector_store %arg5[%101, %c0_26, %c0_27], %104 {strides = array<i32>} : memref<8x2x32xf32, #tpu.memory_space<vmem>>, vector<1x2x32xf32>,
    %c3_i32 = arith.constant 3 : i32
    %105 = arith.index_cast %c3_i32 : i32 to index
    %c0_28 = arith.constant 0 : index
    %c0_29 = arith.constant 0 : index
    %106 = vector.load %arg1[%105, %c0_28, %c0_29] : memref<8x2x128xf32, #tpu.memory_space<vmem>>, vector<1x2x128xf32>
    %107 = vector.shape_cast %106 : vector<1x2x128xf32> to vector<2x128xf32>
    %cst_30 = arith.constant dense<0.000000e+00> : vector<2x128xf32>
    %108 = tpu.matmul %100, %0, %cst_30 {dimension_numbers = #tpu.dot_dimension_numbers<[1], [0], [0], [1], [0, 0, 1, 1], [], []>} : vector<2x32xf32>, vector<32x128xf32>, vector<2x128xf32> -> vector<2x128xf32>
    %109 = arith.addf %107, %108 : vector<2x128xf32>
    %110 = vector.extract_strided_slice %109 {offsets = [0, 0], sizes = [2, 32], strides = [1, 1]} : vector<2x128xf32> to vector<2x32xf32>
    %111 = arith.negf %110 : vector<2x32xf32>
    %112 = math.exp %111 : vector<2x32xf32>
    %cst_31 = arith.constant 1.000000e+00 : f32
    %113 = vector.broadcast %cst_31 : f32 to vector<2x32xf32>
    %114 = arith.addf %113, %112 : vector<2x32xf32>
    %115 = arith.divf %113, %114 : vector<2x32xf32>
    %116 = vector.extract_strided_slice %109 {offsets = [0, 32], sizes = [2, 32], strides = [1, 1]} : vector<2x128xf32> to vector<2x32xf32>
    %117 = arith.negf %116 : vector<2x32xf32>
    %118 = math.exp %117 : vector<2x32xf32>
    %cst_32 = arith.constant 1.000000e+00 : f32
    %119 = vector.broadcast %cst_32 : f32 to vector<2x32xf32>
    %120 = arith.addf %119, %118 : vector<2x32xf32>
    %121 = arith.divf %119, %120 : vector<2x32xf32>
    %122 = vector.extract_strided_slice %109 {offsets = [0, 64], sizes = [2, 32], strides = [1, 1]} : vector<2x128xf32> to vector<2x32xf32>
    %123 = math.tanh %122 : vector<2x32xf32>
    %124 = vector.extract_strided_slice %109 {offsets = [0, 96], sizes = [2, 32], strides = [1, 1]} : vector<2x128xf32> to vector<2x32xf32>
    %125 = arith.negf %124 : vector<2x32xf32>
    %126 = math.exp %125 : vector<2x32xf32>
    %cst_33 = arith.constant 1.000000e+00 : f32
    %127 = vector.broadcast %cst_33 : f32 to vector<2x32xf32>
    %128 = arith.addf %127, %126 : vector<2x32xf32>
    %129 = arith.divf %127, %128 : vector<2x32xf32>
    %130 = arith.mulf %121, %98 : vector<2x32xf32>
    %131 = arith.mulf %115, %123 : vector<2x32xf32>
    %132 = arith.addf %130, %131 : vector<2x32xf32>
    %133 = math.tanh %132 : vector<2x32xf32>
    %134 = arith.mulf %129, %133 : vector<2x32xf32>
    %135 = arith.index_cast %c3_i32 : i32 to index
    %c0_34 = arith.constant 0 : index
    %c0_35 = arith.constant 0 : index
    %136 = vector.load %arg5[%135, %c0_34, %c0_35] : memref<8x2x32xf32, #tpu.memory_space<vmem>>, vector<1x2x32xf32>
    %137 = vector.shape_cast %136 : vector<1x2x32xf32> to vector<2x32xf32>
    %138 = vector.shape_cast %134 : vector<2x32xf32> to vector<1x2x32xf32>
    tpu.vector_store %arg5[%135, %c0_34, %c0_35], %138 {strides = array<i32>} : memref<8x2x32xf32, #tpu.memory_space<vmem>>, vector<1x2x32xf32>,
    %c4_i32 = arith.constant 4 : i32
    %139 = arith.index_cast %c4_i32 : i32 to index
    %c0_36 = arith.constant 0 : index
    %c0_37 = arith.constant 0 : index
    %140 = vector.load %arg1[%139, %c0_36, %c0_37] : memref<8x2x128xf32, #tpu.memory_space<vmem>>, vector<1x2x128xf32>
    %141 = vector.shape_cast %140 : vector<1x2x128xf32> to vector<2x128xf32>
    %cst_38 = arith.constant dense<0.000000e+00> : vector<2x128xf32>
    %142 = tpu.matmul %134, %0, %cst_38 {dimension_numbers = #tpu.dot_dimension_numbers<[1], [0], [0], [1], [0, 0, 1, 1], [], []>} : vector<2x32xf32>, vector<32x128xf32>, vector<2x128xf32> -> vector<2x128xf32>
    %143 = arith.addf %141, %142 : vector<2x128xf32>
    %144 = vector.extract_strided_slice %143 {offsets = [0, 0], sizes = [2, 32], strides = [1, 1]} : vector<2x128xf32> to vector<2x32xf32>
    %145 = arith.negf %144 : vector<2x32xf32>
    %146 = math.exp %145 : vector<2x32xf32>
    %cst_39 = arith.constant 1.000000e+00 : f32
    %147 = vector.broadcast %cst_39 : f32 to vector<2x32xf32>
    %148 = arith.addf %147, %146 : vector<2x32xf32>
    %149 = arith.divf %147, %148 : vector<2x32xf32>
    %150 = vector.extract_strided_slice %143 {offsets = [0, 32], sizes = [2, 32], strides = [1, 1]} : vector<2x128xf32> to vector<2x32xf32>
    %151 = arith.negf %150 : vector<2x32xf32>
    %152 = math.exp %151 : vector<2x32xf32>
    %cst_40 = arith.constant 1.000000e+00 : f32
    %153 = vector.broadcast %cst_40 : f32 to vector<2x32xf32>
    %154 = arith.addf %153, %152 : vector<2x32xf32>
    %155 = arith.divf %153, %154 : vector<2x32xf32>
    %156 = vector.extract_strided_slice %143 {offsets = [0, 64], sizes = [2, 32], strides = [1, 1]} : vector<2x128xf32> to vector<2x32xf32>
    %157 = math.tanh %156 : vector<2x32xf32>
    %158 = vector.extract_strided_slice %143 {offsets = [0, 96], sizes = [2, 32], strides = [1, 1]} : vector<2x128xf32> to vector<2x32xf32>
    %159 = arith.negf %158 : vector<2x32xf32>
    %160 = math.exp %159 : vector<2x32xf32>
    %cst_41 = arith.constant 1.000000e+00 : f32
    %161 = vector.broadcast %cst_41 : f32 to vector<2x32xf32>
    %162 = arith.addf %161, %160 : vector<2x32xf32>
    %163 = arith.divf %161, %162 : vector<2x32xf32>
    %164 = arith.mulf %155, %132 : vector<2x32xf32>
    %165 = arith.mulf %149, %157 : vector<2x32xf32>
    %166 = arith.addf %164, %165 : vector<2x32xf32>
    %167 = math.tanh %166 : vector<2x32xf32>
    %168 = arith.mulf %163, %167 : vector<2x32xf32>
    %169 = arith.index_cast %c4_i32 : i32 to index
    %c0_42 = arith.constant 0 : index
    %c0_43 = arith.constant 0 : index
    %170 = vector.load %arg5[%169, %c0_42, %c0_43] : memref<8x2x32xf32, #tpu.memory_space<vmem>>, vector<1x2x32xf32>
    %171 = vector.shape_cast %170 : vector<1x2x32xf32> to vector<2x32xf32>
    %172 = vector.shape_cast %168 : vector<2x32xf32> to vector<1x2x32xf32>
    tpu.vector_store %arg5[%169, %c0_42, %c0_43], %172 {strides = array<i32>} : memref<8x2x32xf32, #tpu.memory_space<vmem>>, vector<1x2x32xf32>,
    %c5_i32 = arith.constant 5 : i32
    %173 = arith.index_cast %c5_i32 : i32 to index
    %c0_44 = arith.constant 0 : index
    %c0_45 = arith.constant 0 : index
    %174 = vector.load %arg1[%173, %c0_44, %c0_45] : memref<8x2x128xf32, #tpu.memory_space<vmem>>, vector<1x2x128xf32>
    %175 = vector.shape_cast %174 : vector<1x2x128xf32> to vector<2x128xf32>
    %cst_46 = arith.constant dense<0.000000e+00> : vector<2x128xf32>
    %176 = tpu.matmul %168, %0, %cst_46 {dimension_numbers = #tpu.dot_dimension_numbers<[1], [0], [0], [1], [0, 0, 1, 1], [], []>} : vector<2x32xf32>, vector<32x128xf32>, vector<2x128xf32> -> vector<2x128xf32>
    %177 = arith.addf %175, %176 : vector<2x128xf32>
    %178 = vector.extract_strided_slice %177 {offsets = [0, 0], sizes = [2, 32], strides = [1, 1]} : vector<2x128xf32> to vector<2x32xf32>
    %179 = arith.negf %178 : vector<2x32xf32>
    %180 = math.exp %179 : vector<2x32xf32>
    %cst_47 = arith.constant 1.000000e+00 : f32
    %181 = vector.broadcast %cst_47 : f32 to vector<2x32xf32>
    %182 = arith.addf %181, %180 : vector<2x32xf32>
    %183 = arith.divf %181, %182 : vector<2x32xf32>
    %184 = vector.extract_strided_slice %177 {offsets = [0, 32], sizes = [2, 32], strides = [1, 1]} : vector<2x128xf32> to vector<2x32xf32>
    %185 = arith.negf %184 : vector<2x32xf32>
    %186 = math.exp %185 : vector<2x32xf32>
    %cst_48 = arith.constant 1.000000e+00 : f32
    %187 = vector.broadcast %cst_48 : f32 to vector<2x32xf32>
    %188 = arith.addf %187, %186 : vector<2x32xf32>
    %189 = arith.divf %187, %188 : vector<2x32xf32>
    %190 = vector.extract_strided_slice %177 {offsets = [0, 64], sizes = [2, 32], strides = [1, 1]} : vector<2x128xf32> to vector<2x32xf32>
    %191 = math.tanh %190 : vector<2x32xf32>
    %192 = vector.extract_strided_slice %177 {offsets = [0, 96], sizes = [2, 32], strides = [1, 1]} : vector<2x128xf32> to vector<2x32xf32>
    %193 = arith.negf %192 : vector<2x32xf32>
    %194 = math.exp %193 : vector<2x32xf32>
    %cst_49 = arith.constant 1.000000e+00 : f32
    %195 = vector.broadcast %cst_49 : f32 to vector<2x32xf32>
    %196 = arith.addf %195, %194 : vector<2x32xf32>
    %197 = arith.divf %195, %196 : vector<2x32xf32>
    %198 = arith.mulf %189, %166 : vector<2x32xf32>
    %199 = arith.mulf %183, %191 : vector<2x32xf32>
    %200 = arith.addf %198, %199 : vector<2x32xf32>
    %201 = math.tanh %200 : vector<2x32xf32>
    %202 = arith.mulf %197, %201 : vector<2x32xf32>
    %203 = arith.index_cast %c5_i32 : i32 to index
    %c0_50 = arith.constant 0 : index
    %c0_51 = arith.constant 0 : index
    %204 = vector.load %arg5[%203, %c0_50, %c0_51] : memref<8x2x32xf32, #tpu.memory_space<vmem>>, vector<1x2x32xf32>
    %205 = vector.shape_cast %204 : vector<1x2x32xf32> to vector<2x32xf32>
    %206 = vector.shape_cast %202 : vector<2x32xf32> to vector<1x2x32xf32>
    tpu.vector_store %arg5[%203, %c0_50, %c0_51], %206 {strides = array<i32>} : memref<8x2x32xf32, #tpu.memory_space<vmem>>, vector<1x2x32xf32>,
    %c6_i32 = arith.constant 6 : i32
    %207 = arith.index_cast %c6_i32 : i32 to index
    %c0_52 = arith.constant 0 : index
    %c0_53 = arith.constant 0 : index
    %208 = vector.load %arg1[%207, %c0_52, %c0_53] : memref<8x2x128xf32, #tpu.memory_space<vmem>>, vector<1x2x128xf32>
    %209 = vector.shape_cast %208 : vector<1x2x128xf32> to vector<2x128xf32>
    %cst_54 = arith.constant dense<0.000000e+00> : vector<2x128xf32>
    %210 = tpu.matmul %202, %0, %cst_54 {dimension_numbers = #tpu.dot_dimension_numbers<[1], [0], [0], [1], [0, 0, 1, 1], [], []>} : vector<2x32xf32>, vector<32x128xf32>, vector<2x128xf32> -> vector<2x128xf32>
    %211 = arith.addf %209, %210 : vector<2x128xf32>
    %212 = vector.extract_strided_slice %211 {offsets = [0, 0], sizes = [2, 32], strides = [1, 1]} : vector<2x128xf32> to vector<2x32xf32>
    %213 = arith.negf %212 : vector<2x32xf32>
    %214 = math.exp %213 : vector<2x32xf32>
    %cst_55 = arith.constant 1.000000e+00 : f32
    %215 = vector.broadcast %cst_55 : f32 to vector<2x32xf32>
    %216 = arith.addf %215, %214 : vector<2x32xf32>
    %217 = arith.divf %215, %216 : vector<2x32xf32>
    %218 = vector.extract_strided_slice %211 {offsets = [0, 32], sizes = [2, 32], strides = [1, 1]} : vector<2x128xf32> to vector<2x32xf32>
    %219 = arith.negf %218 : vector<2x32xf32>
    %220 = math.exp %219 : vector<2x32xf32>
    %cst_56 = arith.constant 1.000000e+00 : f32
    %221 = vector.broadcast %cst_56 : f32 to vector<2x32xf32>
    %222 = arith.addf %221, %220 : vector<2x32xf32>
    %223 = arith.divf %221, %222 : vector<2x32xf32>
    %224 = vector.extract_strided_slice %211 {offsets = [0, 64], sizes = [2, 32], strides = [1, 1]} : vector<2x128xf32> to vector<2x32xf32>
    %225 = math.tanh %224 : vector<2x32xf32>
    %226 = vector.extract_strided_slice %211 {offsets = [0, 96], sizes = [2, 32], strides = [1, 1]} : vector<2x128xf32> to vector<2x32xf32>
    %227 = arith.negf %226 : vector<2x32xf32>
    %228 = math.exp %227 : vector<2x32xf32>
    %cst_57 = arith.constant 1.000000e+00 : f32
    %229 = vector.broadcast %cst_57 : f32 to vector<2x32xf32>
    %230 = arith.addf %229, %228 : vector<2x32xf32>
    %231 = arith.divf %229, %230 : vector<2x32xf32>
    %232 = arith.mulf %223, %200 : vector<2x32xf32>
    %233 = arith.mulf %217, %225 : vector<2x32xf32>
    %234 = arith.addf %232, %233 : vector<2x32xf32>
    %235 = math.tanh %234 : vector<2x32xf32>
    %236 = arith.mulf %231, %235 : vector<2x32xf32>
    %237 = arith.index_cast %c6_i32 : i32 to index
    %c0_58 = arith.constant 0 : index
    %c0_59 = arith.constant 0 : index
    %238 = vector.load %arg5[%237, %c0_58, %c0_59] : memref<8x2x32xf32, #tpu.memory_space<vmem>>, vector<1x2x32xf32>
    %239 = vector.shape_cast %238 : vector<1x2x32xf32> to vector<2x32xf32>
    %240 = vector.shape_cast %236 : vector<2x32xf32> to vector<1x2x32xf32>
    tpu.vector_store %arg5[%237, %c0_58, %c0_59], %240 {strides = array<i32>} : memref<8x2x32xf32, #tpu.memory_space<vmem>>, vector<1x2x32xf32>,
    %c7_i32 = arith.constant 7 : i32
    %241 = arith.index_cast %c7_i32 : i32 to index
    %c0_60 = arith.constant 0 : index
    %c0_61 = arith.constant 0 : index
    %242 = vector.load %arg1[%241, %c0_60, %c0_61] : memref<8x2x128xf32, #tpu.memory_space<vmem>>, vector<1x2x128xf32>
    %243 = vector.shape_cast %242 : vector<1x2x128xf32> to vector<2x128xf32>
    %cst_62 = arith.constant dense<0.000000e+00> : vector<2x128xf32>
    %244 = tpu.matmul %236, %0, %cst_62 {dimension_numbers = #tpu.dot_dimension_numbers<[1], [0], [0], [1], [0, 0, 1, 1], [], []>} : vector<2x32xf32>, vector<32x128xf32>, vector<2x128xf32> -> vector<2x128xf32>
    %245 = arith.addf %243, %244 : vector<2x128xf32>
    %246 = vector.extract_strided_slice %245 {offsets = [0, 0], sizes = [2, 32], strides = [1, 1]} : vector<2x128xf32> to vector<2x32xf32>
    %247 = arith.negf %246 : vector<2x32xf32>
    %248 = math.exp %247 : vector<2x32xf32>
    %cst_63 = arith.constant 1.000000e+00 : f32
    %249 = vector.broadcast %cst_63 : f32 to vector<2x32xf32>
    %250 = arith.addf %249, %248 : vector<2x32xf32>
    %251 = arith.divf %249, %250 : vector<2x32xf32>
    %252 = vector.extract_strided_slice %245 {offsets = [0, 32], sizes = [2, 32], strides = [1, 1]} : vector<2x128xf32> to vector<2x32xf32>
    %253 = arith.negf %252 : vector<2x32xf32>
    %254 = math.exp %253 : vector<2x32xf32>
    %cst_64 = arith.constant 1.000000e+00 : f32
    %255 = vector.broadcast %cst_64 : f32 to vector<2x32xf32>
    %256 = arith.addf %255, %254 : vector<2x32xf32>
    %257 = arith.divf %255, %256 : vector<2x32xf32>
    %258 = vector.extract_strided_slice %245 {offsets = [0, 64], sizes = [2, 32], strides = [1, 1]} : vector<2x128xf32> to vector<2x32xf32>
    %259 = math.tanh %258 : vector<2x32xf32>
    %260 = vector.extract_strided_slice %245 {offsets = [0, 96], sizes = [2, 32], strides = [1, 1]} : vector<2x128xf32> to vector<2x32xf32>
    %261 = arith.negf %260 : vector<2x32xf32>
    %262 = math.exp %261 : vector<2x32xf32>
    %cst_65 = arith.constant 1.000000e+00 : f32
    %263 = vector.broadcast %cst_65 : f32 to vector<2x32xf32>
    %264 = arith.addf %263, %262 : vector<2x32xf32>
    %265 = arith.divf %263, %264 : vector<2x32xf32>
    %266 = arith.mulf %257, %234 : vector<2x32xf32>
    %267 = arith.mulf %251, %259 : vector<2x32xf32>
    %268 = arith.addf %266, %267 : vector<2x32xf32>
    %269 = math.tanh %268 : vector<2x32xf32>
    %270 = arith.mulf %265, %269 : vector<2x32xf32>
    %271 = arith.index_cast %c7_i32 : i32 to index
    %c0_66 = arith.constant 0 : index
    %c0_67 = arith.constant 0 : index
    %272 = vector.load %arg5[%271, %c0_66, %c0_67] : memref<8x2x32xf32, #tpu.memory_space<vmem>>, vector<1x2x32xf32>
    %273 = vector.shape_cast %272 : vector<1x2x32xf32> to vector<2x32xf32>
    %274 = vector.shape_cast %270 : vector<2x32xf32> to vector<1x2x32xf32>
    tpu.vector_store %arg5[%271, %c0_66, %c0_67], %274 {strides = array<i32>} : memref<8x2x32xf32, #tpu.memory_space<vmem>>, vector<1x2x32xf32>,
    %c8_i32 = arith.constant 8 : i32
    %c0_68 = arith.constant 0 : index
    %c0_69 = arith.constant 0 : index
    %275 = vector.load %arg6[%c0_68, %c0_69] : memref<2x32xf32, #tpu.memory_space<vmem>>, vector<2x32xf32>
    tpu.vector_store %arg6[%c0_68, %c0_69], %268 {strides = array<i32>} : memref<2x32xf32, #tpu.memory_space<vmem>>, vector<2x32xf32>,
    return
  }
  func.func @transform_0(%arg0: i32) -> (i32, i32, i32) {
    %c0_i32 = arith.constant 0 : i32
    %c0_i32_0 = arith.constant 0 : i32
    %c0_i32_1 = arith.constant 0 : i32
    %c0_i32_2 = arith.constant 0 : i32
    return %c0_i32, %c0_i32_0, %c0_i32_1 : i32, i32, i32
  }
  func.func @transform_1(%arg0: i32) -> (i32, i32) {
    %c0_i32 = arith.constant 0 : i32
    %c0_i32_0 = arith.constant 0 : i32
    %c0_i32_1 = arith.constant 0 : i32
    return %c0_i32, %c0_i32_0 : i32, i32
  }
  func.func @transform_2(%arg0: i32) -> (i32, i32) {
    %c0_i32 = arith.constant 0 : i32
    %c0_i32_0 = arith.constant 0 : i32
    %c0_i32_1 = arith.constant 0 : i32
    return %c0_i32, %c0_i32_0 : i32, i32
  }
  func.func @transform_3(%arg0: i32) -> (i32, i32) {
    %c0_i32 = arith.constant 0 : i32
    %c0_i32_0 = arith.constant 0 : i32
    %c0_i32_1 = arith.constant 0 : i32
    return %c0_i32, %c0_i32_0 : i32, i32
  }
  func.func @transform_4(%arg0: i32) -> (i32, i32, i32) {
    %c0_i32 = arith.constant 0 : i32
    %c0_i32_0 = arith.constant 0 : i32
    %c0_i32_1 = arith.constant 0 : i32
    %c0_i32_2 = arith.constant 0 : i32
    return %c0_i32, %c0_i32_0, %c0_i32_1 : i32, i32, i32
  }
  func.func @transform_5(%arg0: i32) -> (i32, i32) {
    %c0_i32 = arith.constant 0 : i32
    %c0_i32_0 = arith.constant 0 : i32
    %c0_i32_1 = arith.constant 0 : i32
    return %c0_i32, %c0_i32_0 : i32, i32
  }
}

</mosaic_0001>

<llo_original>
// kernel: tpu_custom_call.1
$region0: #{tpu_custom_call.1}
  #allocation0 [shape = 'u32[]', space=smem, size = 0x4, offset = 0x4, fixed_abs, tag = 'smem constant byte address 0x4 - core index']
  #allocation1 [shape = 'u32[144,128]{1,0:T(1,128)}', space=vmem, size = 0x12000, scoped, tag = 'internal scratch']
  %s0 = inlined_call_operand.hbm [shape: f32[8,2,128], index: 0, kind: input, shape index: {}]
  %s1 = inlined_call_operand.hbm [shape: f32[32,128], index: 1, kind: input, shape index: {}]
  %s2 = inlined_call_operand.vmem [shape: f32[2,32], index: 2, kind: input, shape index: {}]
  %s3 = inlined_call_operand.vmem [shape: f32[2,32], index: 3, kind: input, shape index: {}]
  %s4 = inlined_call_operand.hbm [shape: f32[8,2,32], index: 4, kind: output, shape index: {0}]
  %s5 = inlined_call_operand.hbm [shape: f32[2,32], index: 5, kind: output, shape index: {1}]
  %6 = xla_tuple %s4, %s5
  %s7 = sld [smem:[#allocation0]]
  $region42: #{tpu_custom_call.1} parent=0
    _
  %s9 = ssub.s32 1, %s7
  %s10 = scalar_select 0, %s9, %s7
  $region1: #{tpu_custom_call.1} parent=0
    #allocation2 [shape = 'u8[8192]{0}', space=vmem, size = 0x2000, scoped, tag = 'input window, operand 0, single buffered']
    #allocation3 [shape = 's32[1]{0}', space=sflag, size = 0x4, scoped, tag = 'scoped memory for tpu_custom_call.1']
    #allocation4 [shape = 's32[1]{0}', space=sflag, size = 0x4, scoped, tag = 'scoped memory for tpu_custom_call.1']
    #allocation5 [shape = 'u8[16384]{0}', space=vmem, size = 0x4000, scoped, tag = 'input window, operand 1, single buffered']
    #allocation6 [shape = 's32[1]{0}', space=sflag, size = 0x4, scoped, tag = 'scoped memory for tpu_custom_call.1']
    #allocation7 [shape = 'u8[8192]{0}', space=vmem, size = 0x2000, scoped, tag = 'output window, operand 0, single buffered']
    #allocation8 [shape = 'u8[1024]{0}', space=vmem, size = 0x400, scoped, tag = 'output window, operand 1, single buffered']
    #allocation9 [shape = 's32[1]{0}', space=sflag, size = 0x4, scoped, tag = 'scoped memory for tpu_custom_call.1']
    %11 = vsyncpa [#allocation3], 0
    %12 = vsyncpa [#allocation6], 0
    %13 = vsyncpa [#allocation4], 0
    %14 = vsyncpa [#allocation9], 0
    // Predicated region
    $region2: #{tpu_custom_call.1} parent=1 // pred_check
      _
    $region3: #{tpu_custom_call.1} parent=1 // pred_check_branch
      %16 = sbr.rel (0) target = $region5
    $region4: #{tpu_custom_call.1} parent=1 // pred_region
      %s18 = ssub.s32 256, 256
      %19 = vsyncadd [#allocation3], %s18
      %s20 = sshll.u32 [#allocation2], 4
      %s21 = int_to_ptr.vmem [resolvable:$true] %s20
      %26 = dma.hbm_to_vmem [thread:$0]  %s0, 256, %s21, [#allocation3], 32, 32, 2
    $region5: #{tpu_custom_call.1} parent=1 // pred_fallthru
      _
    // Predicated region
    $region6: #{tpu_custom_call.1} parent=1 // pred_check
      _
    $region7: #{tpu_custom_call.1} parent=1 // pred_check_branch
      %28 = sbr.rel (0) target = $region9
    $region8: #{tpu_custom_call.1} parent=1 // pred_region
      %s30 = ssub.s32 512, 512
      %31 = vsyncadd [#allocation6], %s30
      %s32 = sshll.u32 [#allocation5], 4
      %s33 = int_to_ptr.vmem [resolvable:$true] %s32
      %38 = dma.hbm_to_vmem [thread:$0]  %s1, 512, %s33, [#allocation6], 128, 128, 8
    $region9: #{tpu_custom_call.1} parent=1 // pred_fallthru
      _
    // Predicated region
    $region10: #{tpu_custom_call.1} parent=1 // pred_check
      _
    $region11: #{tpu_custom_call.1} parent=1 // pred_check_branch
      %40 = sbr.rel (0) target = $region13
    $region12: #{tpu_custom_call.1} parent=1 // pred_region
      _
    $region13: #{tpu_custom_call.1} parent=1 // pred_fallthru
      _
    // Predicated region
    $region14: #{tpu_custom_call.1} parent=1 // pred_check
      _
    $region15: #{tpu_custom_call.1} parent=1 // pred_check_branch
      %42 = sbr.rel (0) target = $region17
    $region16: #{tpu_custom_call.1} parent=1 // pred_region
      _
    $region17: #{tpu_custom_call.1} parent=1 // pred_fallthru
      _
    // Predicated region
    $region18: #{tpu_custom_call.1} parent=1 // pred_check
      _
    $region19: #{tpu_custom_call.1} parent=1 // pred_check_branch
      %44 = sbr.rel (0) target = $region21
    $region20: #{tpu_custom_call.1} parent=1 // pred_region
      %45 = dma.done [#allocation3], 256
    $region21: #{tpu_custom_call.1} parent=1 // pred_fallthru
      _
    // Predicated region
    $region22: #{tpu_custom_call.1} parent=1 // pred_check
      _
    $region23: #{tpu_custom_call.1} parent=1 // pred_check_branch
      %47 = sbr.rel (0) target = $region25
    $region24: #{tpu_custom_call.1} parent=1 // pred_region
      %48 = dma.done [#allocation6], 512
    $region25: #{tpu_custom_call.1} parent=1 // pred_fallthru
      _
    %v49 = vld [vmem:[#allocation5] sm:$0xff]
    %v50 = vld [vmem:[#allocation5 + $0x8] sm:$0xff]
    %v51 = vld [vmem:[#allocation5 + $0x10] sm:$0xff]
    %v52 = vld [vmem:[#allocation5 + $0x18] sm:$0xff]
    %v53 = vld [vmem:[%s2] sm:$0x3]
    %v54 = vld [vmem:[%s3] sm:$0x3]
    %v55 = vld [vmem:[#allocation2] sm:$0x3]
    %vm56 = vcmask 261120
    %v58 = vsel %vm56, %v53, 0
    %60 = vmatprep.subr.mxu0 0.0
    %61 = vmatpush1.msra.mxu0 %v49
    %62 = vmatprep.subr.mxu0 0.0
    %63 = vmatpush1.msra.mxu0 %v50
    %64 = vmatprep.subr.mxu0 0.0
    %65 = vmatpush1.msra.mxu0 %v51
    %66 = vmatprep.subr.mxu0 0.0
    %67 = vmatpush1.msra.mxu0 %v52
    %68 = vmatprep.subr.mxu0 0.0
    %69 = vmatpush1.msra.mxu0 0.0
    %70 = vmatprep.subr.mxu0 0.0
    %71 = vmatpush1.msra.mxu0 0.0
    %72 = vmatprep.subr.mxu0 0.0
    %73 = vmatpush1.msra.mxu0 0.0
    %74 = vmatprep.subr.mxu0 0.0
    %75 = vmatpush1.msra.mxu0 0.0
    %76 = vmatprep.subr.mxu0 0.0
    %77 = vmatpush1.msra.mxu0 0.0
    %78 = vmatprep.subr.mxu0 0.0
    %79 = vmatpush1.msra.mxu0 0.0
    %80 = vmatprep.subr.mxu0 0.0
    %81 = vmatpush1.msra.mxu0 0.0
    %82 = vmatprep.subr.mxu0 0.0
    %83 = vmatpush1.msra.mxu0 0.0
    %84 = vmatprep.subr.mxu0 0.0
    %85 = vmatpush1.msra.mxu0 0.0
    %86 = vmatprep.subr.mxu0 0.0
    %87 = vmatpush1.msra.mxu0 0.0
    %88 = vmatprep.subr.mxu0 0.0
    %89 = vmatpush1.msra.mxu0 0.0
    %90 = vmatprep.subr.mxu0 0.0
    %91 = vmatpush1.msra.mxu0 0.0
    %92 = vmatprep.subr.mxu0 0.0
    %93 = vmatpush1.msra.mxu0 0.0
    %94 = vmatprep.subr.mxu0 0.0
    %95 = vmatpush1.msra.mxu0 0.0
    %96 = vmatprep.subr.mxu0 0.0
    %97 = vmatpush1.msra.mxu0 0.0
    %98 = vmatprep.subr.mxu0 0.0
    %99 = vmatpush1.msra.mxu0 0.0
    %100 = vmatprep.subr.mxu0 0.0
    %101 = vmatpush1.msra.mxu0 0.0
    %102 = vmatprep.subr.mxu0 0.0
    %103 = vmatpush1.msra.mxu0 0.0
    %104 = vmatprep.subr.mxu0 0.0
    %105 = vmatpush1.msra.mxu0 0.0
    %106 = vmatprep.subr.mxu0 0.0
    %107 = vmatpush1.msra.mxu0 0.0
    %108 = vmatprep.subr.mxu0 0.0
    %109 = vmatpush1.msra.mxu0 0.0
    %110 = vmatprep.subr.mxu0 0.0
    %111 = vmatpush1.msra.mxu0 0.0
    %112 = vmatprep.subr.mxu0 0.0
    %113 = vmatpush1.msra.mxu0 0.0
    %114 = vmatprep.subr.mxu0 0.0
    %115 = vmatpush1.msra.mxu0 0.0
    %116 = vmatprep.subr.mxu0 0.0
    %117 = vmatpush1.msra.mxu0 0.0
    %118 = vmatprep.subr.mxu0 0.0
    %119 = vmatpush1.msra.mxu0 0.0
    %120 = vmatprep.subr.mxu0 0.0
    %121 = vmatpush1.msra.mxu0 0.0
    %122 = vmatprep.subr.mxu0 0.0
    %123 = vmatpush1.msra.mxu0 0.0
    %124 = vmatprep.mubr.f32.mxu0 0.0
    %125 = vmatmul.mubr.f32.gmra.mrb[0].mxu0 %v58
    %v126 = vpop.f32.mrb[0].mxu0
    %v127 = vadd.f32 0.0, %v126
    %v128 = vpop.f32.mrb[0].mxu0
    %129 = vdwg.mxu0
    %v130 = vadd.f32 %v55, %v127
    %v131 = vxor.u32 %v130, 2147483648
    %v132 = vmul.f32 %v131, 1.442695
    %v133 = vpow.pop %v132
    %v134 = vadd.f32 %v133, 1.0
    %v135 = vrcp.pop %v134
    %v136 = vmul.f32 1.0, %v135
    %v137 = vtanh.pop %v130
    %139 = vrot.lane.b32.xlu0 %v54, 32
    %v140 = vpop.permute.xlu0 %139
    %v142 = vmul.f32 %v136, %v140
    %144 = vrot.lane.b32.xlu0 %v137, 64
    %v145 = vpop.permute.xlu0 %144
    %v147 = vmul.f32 %v136, %v145
    %149 = vrot.lane.b32.xlu0 %v147, 32
    %v150 = vpop.permute.xlu0 %149
    %v152 = vadd.f32 %v142, %v150
    %v153 = vtanh.pop %v152
    %155 = vrot.lane.b32.xlu0 %v153, 64
    %v156 = vpop.permute.xlu0 %155
    %v158 = vmul.f32 %v136, %v156
    %160 = vrot.lane.b32.xlu0 %v158, 32
    %v161 = vpop.permute.xlu0 %160
    %vm163 = vcmask 254976
    %164 = vst.msk [vmem:[#allocation7] sm:$0x3] %vm163, %v161
    %s165 = scalar_lea.vmem [#allocation2], 2
    %v166 = vld [vmem:[%s165] sm:$0x3]
    %v167 = vsel %vm56, %v161, 0
    %169 = vmatprep.subr.mxu0 0.0
    %170 = vmatpush1.msra.mxu0 %v49
    %171 = vmatprep.subr.mxu0 0.0
    %172 = vmatpush1.msra.mxu0 %v50
    %173 = vmatprep.subr.mxu0 0.0
    %174 = vmatpush1.msra.mxu0 %v51
    %175 = vmatprep.subr.mxu0 0.0
    %176 = vmatpush1.msra.mxu0 %v52
    %177 = vmatprep.subr.mxu0 0.0
    %178 = vmatpush1.msra.mxu0 0.0
    %179 = vmatprep.subr.mxu0 0.0
    %180 = vmatpush1.msra.mxu0 0.0
    %181 = vmatprep.subr.mxu0 0.0
    %182 = vmatpush1.msra.mxu0 0.0
    %183 = vmatprep.subr.mxu0 0.0
    %184 = vmatpush1.msra.mxu0 0.0
    %185 = vmatprep.subr.mxu0 0.0
    %186 = vmatpush1.msra.mxu0 0.0
    %187 = vmatprep.subr.mxu0 0.0
    %188 = vmatpush1.msra.mxu0 0.0
    %189 = vmatprep.subr.mxu0 0.0
    %190 = vmatpush1.msra.mxu0 0.0
    %191 = vmatprep.subr.mxu0 0.0
    %192 = vmatpush1.msra.mxu0 0.0
    %193 = vmatprep.subr.mxu0 0.0
    %194 = vmatpush1.msra.mxu0 0.0
    %195 = vmatprep.subr.mxu0 0.0
    %196 = vmatpush1.msra.mxu0 0.0
    %197 = vmatprep.subr.mxu0 0.0
    %198 = vmatpush1.msra.mxu0 0.0
    %199 = vmatprep.subr.mxu0 0.0
    %200 = vmatpush1.msra.mxu0 0.0
    %201 = vmatprep.subr.mxu0 0.0
    %202 = vmatpush1.msra.mxu0 0.0
    %203 = vmatprep.subr.mxu0 0.0
    %204 = vmatpush1.msra.mxu0 0.0
    %205 = vmatprep.subr.mxu0 0.0
    %206 = vmatpush1.msra.mxu0 0.0
    %207 = vmatprep.subr.mxu0 0.0
    %208 = vmatpush1.msra.mxu0 0.0
    %209 = vmatprep.subr.mxu0 0.0
    %210 = vmatpush1.msra.mxu0 0.0
    %211 = vmatprep.subr.mxu0 0.0
    %212 = vmatpush1.msra.mxu0 0.0
    %213 = vmatprep.subr.mxu0 0.0
    %214 = vmatpush1.msra.mxu0 0.0
    %215 = vmatprep.subr.mxu0 0.0
    %216 = vmatpush1.msra.mxu0 0.0
    %217 = vmatprep.subr.mxu0 0.0
    %218 = vmatpush1.msra.mxu0 0.0
    %219 = vmatprep.subr.mxu0 0.0
    %220 = vmatpush1.msra.mxu0 0.0
    %221 = vmatprep.subr.mxu0 0.0
    %222 = vmatpush1.msra.mxu0 0.0
    %223 = vmatprep.subr.mxu0 0.0
    %224 = vmatpush1.msra.mxu0 0.0
    %225 = vmatprep.subr.mxu0 0.0
    %226 = vmatpush1.msra.mxu0 0.0
    %227 = vmatprep.subr.mxu0 0.0
    %228 = vmatpush1.msra.mxu0 0.0
    %229 = vmatprep.subr.mxu0 0.0
    %230 = vmatpush1.msra.mxu0 0.0
    %231 = vmatprep.subr.mxu0 0.0
    %232 = vmatpush1.msra.mxu0 0.0
    %233 = vmatprep.mubr.f32.mxu0 0.0
    %234 = vmatmul.mubr.f32.gmra.mrb[0].mxu0 %v167
    %v235 = vpop.f32.mrb[0].mxu0
    %v236 = vadd.f32 0.0, %v235
    %v237 = vpop.f32.mrb[0].mxu0
    %238 = vdwg.mxu0
    %v239 = vadd.f32 %v166, %v236
    %v240 = vxor.u32 %v239, 2147483648
    %v241 = vmul.f32 %v240, 1.442695
    %v242 = vpow.pop %v241
    %v243 = vadd.f32 %v242, 1.0
    %v244 = vrcp.pop %v243
    %v245 = vmul.f32 1.0, %v244
    %v246 = vtanh.pop %v239
    %v247 = vmul.f32 %v245, %v152
    %249 = vrot.lane.b32.xlu0 %v246, 64
    %v250 = vpop.permute.xlu0 %249
    %v252 = vmul.f32 %v245, %v250
    %254 = vrot.lane.b32.xlu0 %v252, 32
    %v255 = vpop.permute.xlu0 %254
    %v257 = vadd.f32 %v247, %v255
    %v258 = vtanh.pop %v257
    %260 = vrot.lane.b32.xlu0 %v258, 64
    %v261 = vpop.permute.xlu0 %260
    %v263 = vmul.f32 %v245, %v261
    %265 = vrot.lane.b32.xlu0 %v263, 32
    %v266 = vpop.permute.xlu0 %265
    %s268 = scalar_lea.vmem [#allocation7], 2
    %269 = vst.msk [vmem:[%s268] sm:$0x3] %vm163, %v266
    %s270 = scalar_lea.vmem [#allocation2], 4
    %v271 = vld [vmem:[%s270] sm:$0x3]
    %v272 = vsel %vm56, %v266, 0
    %274 = vmatprep.subr.mxu0 0.0
    %275 = vmatpush1.msra.mxu0 %v49
    %276 = vmatprep.subr.mxu0 0.0
    %277 = vmatpush1.msra.mxu0 %v50
    %278 = vmatprep.subr.mxu0 0.0
    %279 = vmatpush1.msra.mxu0 %v51
    %280 = vmatprep.subr.mxu0 0.0
    %281 = vmatpush1.msra.mxu0 %v52
    %282 = vmatprep.subr.mxu0 0.0
    %283 = vmatpush1.msra.mxu0 0.0
    %284 = vmatprep.subr.mxu0 0.0
    %285 = vmatpush1.msra.mxu0 0.0
    %286 = vmatprep.subr.mxu0 0.0
    %287 = vmatpush1.msra.mxu0 0.0
    %288 = vmatprep.subr.mxu0 0.0
    %289 = vmatpush1.msra.mxu0 0.0
    %290 = vmatprep.subr.mxu0 0.0
    %291 = vmatpush1.msra.mxu0 0.0
    %292 = vmatprep.subr.mxu0 0.0
    %293 = vmatpush1.msra.mxu0 0.0
    %294 = vmatprep.subr.mxu0 0.0
    %295 = vmatpush1.msra.mxu0 0.0
    %296 = vmatprep.subr.mxu0 0.0
    %297 = vmatpush1.msra.mxu0 0.0
    %298 = vmatprep.subr.mxu0 0.0
    %299 = vmatpush1.msra.mxu0 0.0
    %300 = vmatprep.subr.mxu0 0.0
    %301 = vmatpush1.msra.mxu0 0.0
    %302 = vmatprep.subr.mxu0 0.0
    %303 = vmatpush1.msra.mxu0 0.0
    %304 = vmatprep.subr.mxu0 0.0
    %305 = vmatpush1.msra.mxu0 0.0
    %306 = vmatprep.subr.mxu0 0.0
    %307 = vmatpush1.msra.mxu0 0.0
    %308 = vmatprep.subr.mxu0 0.0
    %309 = vmatpush1.msra.mxu0 0.0
    %310 = vmatprep.subr.mxu0 0.0
    %311 = vmatpush1.msra.mxu0 0.0
    %312 = vmatprep.subr.mxu0 0.0
    %313 = vmatpush1.msra.mxu0 0.0
    %314 = vmatprep.subr.mxu0 0.0
    %315 = vmatpush1.msra.mxu0 0.0
    %316 = vmatprep.subr.mxu0 0.0
    %317 = vmatpush1.msra.mxu0 0.0
    %318 = vmatprep.subr.mxu0 0.0
    %319 = vmatpush1.msra.mxu0 0.0
    %320 = vmatprep.subr.mxu0 0.0
    %321 = vmatpush1.msra.mxu0 0.0
    %322 = vmatprep.subr.mxu0 0.0
    %323 = vmatpush1.msra.mxu0 0.0
    %324 = vmatprep.subr.mxu0 0.0
    %325 = vmatpush1.msra.mxu0 0.0
    %326 = vmatprep.subr.mxu0 0.0
    %327 = vmatpush1.msra.mxu0 0.0
    %328 = vmatprep.subr.mxu0 0.0
    %329 = vmatpush1.msra.mxu0 0.0
    %330 = vmatprep.subr.mxu0 0.0
    %331 = vmatpush1.msra.mxu0 0.0
    %332 = vmatprep.subr.mxu0 0.0
    %333 = vmatpush1.msra.mxu0 0.0
    %334 = vmatprep.subr.mxu0 0.0
    %335 = vmatpush1.msra.mxu0 0.0
    %336 = vmatprep.subr.mxu0 0.0
    %337 = vmatpush1.msra.mxu0 0.0
    %338 = vmatprep.mubr.f32.mxu0 0.0
    %339 = vmatmul.mubr.f32.gmra.mrb[0].mxu0 %v272
    %v340 = vpop.f32.mrb[0].mxu0
    %v341 = vadd.f32 0.0, %v340
    %v342 = vpop.f32.mrb[0].mxu0
    %343 = vdwg.mxu0
    %v344 = vadd.f32 %v271, %v341
    %v345 = vxor.u32 %v344, 2147483648
    %v346 = vmul.f32 %v345, 1.442695
    %v347 = vpow.pop %v346
    %v348 = vadd.f32 %v347, 1.0
    %v349 = vrcp.pop %v348
    %v350 = vmul.f32 1.0, %v349
    %v351 = vtanh.pop %v344
    %v352 = vmul.f32 %v350, %v257
    %354 = vrot.lane.b32.xlu0 %v351, 64
    %v355 = vpop.permute.xlu0 %354
    %v357 = vmul.f32 %v350, %v355
    %359 = vrot.lane.b32.xlu0 %v357, 32
    %v360 = vpop.permute.xlu0 %359
    %v362 = vadd.f32 %v352, %v360
    %v363 = vtanh.pop %v362
    %365 = vrot.lane.b32.xlu0 %v363, 64
    %v366 = vpop.permute.xlu0 %365
    %v368 = vmul.f32 %v350, %v366
    %370 = vrot.lane.b32.xlu0 %v368, 32
    %v371 = vpop.permute.xlu0 %370
    %s373 = scalar_lea.vmem [#allocation7], 4
    %374 = vst.msk [vmem:[%s373] sm:$0x3] %vm163, %v371
    %s375 = scalar_lea.vmem [#allocation2], 6
    %v376 = vld [vmem:[%s375] sm:$0x3]
    %v377 = vsel %vm56, %v371, 0
    %379 = vmatprep.subr.mxu0 0.0
    %380 = vmatpush1.msra.mxu0 %v49
    %381 = vmatprep.subr.mxu0 0.0
    %382 = vmatpush1.msra.mxu0 %v50
    %383 = vmatprep.subr.mxu0 0.0
    %384 = vmatpush1.msra.mxu0 %v51
    %385 = vmatprep.subr.mxu0 0.0
    %386 = vmatpush1.msra.mxu0 %v52
    %387 = vmatprep.subr.mxu0 0.0
    %388 = vmatpush1.msra.mxu0 0.0
    %389 = vmatprep.subr.mxu0 0.0
    %390 = vmatpush1.msra.mxu0 0.0
    %391 = vmatprep.subr.mxu0 0.0
    %392 = vmatpush1.msra.mxu0 0.0
    %393 = vmatprep.subr.mxu0 0.0
    %394 = vmatpush1.msra.mxu0 0.0
    %395 = vmatprep.subr.mxu0 0.0
    %396 = vmatpush1.msra.mxu0 0.0
    %397 = vmatprep.subr.mxu0 0.0
    %398 = vmatpush1.msra.mxu0 0.0
    %399 = vmatprep.subr.mxu0 0.0
    %400 = vmatpush1.msra.mxu0 0.0
    %401 = vmatprep.subr.mxu0 0.0
    %402 = vmatpush1.msra.mxu0 0.0
    %403 = vmatprep.subr.mxu0 0.0
    %404 = vmatpush1.msra.mxu0 0.0
    %405 = vmatprep.subr.mxu0 0.0
    %406 = vmatpush1.msra.mxu0 0.0
    %407 = vmatprep.subr.mxu0 0.0
    %408 = vmatpush1.msra.mxu0 0.0
    %409 = vmatprep.subr.mxu0 0.0
    %410 = vmatpush1.msra.mxu0 0.0
    %411 = vmatprep.subr.mxu0 0.0
    %412 = vmatpush1.msra.mxu0 0.0
    %413 = vmatprep.subr.mxu0 0.0
    %414 = vmatpush1.msra.mxu0 0.0
    %415 = vmatprep.subr.mxu0 0.0
    %416 = vmatpush1.msra.mxu0 0.0
    %417 = vmatprep.subr.mxu0 0.0
    %418 = vmatpush1.msra.mxu0 0.0
    %419 = vmatprep.subr.mxu0 0.0
    %420 = vmatpush1.msra.mxu0 0.0
    %421 = vmatprep.subr.mxu0 0.0
    %422 = vmatpush1.msra.mxu0 0.0
    %423 = vmatprep.subr.mxu0 0.0
    %424 = vmatpush1.msra.mxu0 0.0
    %425 = vmatprep.subr.mxu0 0.0
    %426 = vmatpush1.msra.mxu0 0.0
    %427 = vmatprep.subr.mxu0 0.0
    %428 = vmatpush1.msra.mxu0 0.0
    %429 = vmatprep.subr.mxu0 0.0
    %430 = vmatpush1.msra.mxu0 0.0
    %431 = vmatprep.subr.mxu0 0.0
    %432 = vmatpush1.msra.mxu0 0.0
    %433 = vmatprep.subr.mxu0 0.0
    %434 = vmatpush1.msra.mxu0 0.0
    %435 = vmatprep.subr.mxu0 0.0
    %436 = vmatpush1.msra.mxu0 0.0
    %437 = vmatprep.subr.mxu0 0.0
    %438 = vmatpush1.msra.mxu0 0.0
    %439 = vmatprep.subr.mxu0 0.0
    %440 = vmatpush1.msra.mxu0 0.0
    %441 = vmatprep.subr.mxu0 0.0
    %442 = vmatpush1.msra.mxu0 0.0
    %443 = vmatprep.mubr.f32.mxu0 0.0
    %444 = vmatmul.mubr.f32.gmra.mrb[0].mxu0 %v377
    %v445 = vpop.f32.mrb[0].mxu0
    %v446 = vadd.f32 0.0, %v445
    %v447 = vpop.f32.mrb[0].mxu0
    %448 = vdwg.mxu0
    %v449 = vadd.f32 %v376, %v446
    %v450 = vxor.u32 %v449, 2147483648
    %v451 = vmul.f32 %v450, 1.442695
    %v452 = vpow.pop %v451
    %v453 = vadd.f32 %v452, 1.0
    %v454 = vrcp.pop %v453
    %v455 = vmul.f32 1.0, %v454
    %v456 = vtanh.pop %v449
    %v457 = vmul.f32 %v455, %v362
    %459 = vrot.lane.b32.xlu0 %v456, 64
    %v460 = vpop.permute.xlu0 %459
    %v462 = vmul.f32 %v455, %v460
    %464 = vrot.lane.b32.xlu0 %v462, 32
    %v465 = vpop.permute.xlu0 %464
    %v467 = vadd.f32 %v457, %v465
    %v468 = vtanh.pop %v467
    %470 = vrot.lane.b32.xlu0 %v468, 64
    %v471 = vpop.permute.xlu0 %470
    %v473 = vmul.f32 %v455, %v471
    %475 = vrot.lane.b32.xlu0 %v473, 32
    %v476 = vpop.permute.xlu0 %475
    %s478 = scalar_lea.vmem [#allocation7], 6
    %479 = vst.msk [vmem:[%s478] sm:$0x3] %vm163, %v476
    %s480 = scalar_lea.vmem [#allocation2], 8
    %v481 = vld [vmem:[%s480] sm:$0x3]
    %v482 = vsel %vm56, %v476, 0
    %484 = vmatprep.subr.mxu0 0.0
    %485 = vmatpush1.msra.mxu0 %v49
    %486 = vmatprep.subr.mxu0 0.0
    %487 = vmatpush1.msra.mxu0 %v50
    %488 = vmatprep.subr.mxu0 0.0
    %489 = vmatpush1.msra.mxu0 %v51
    %490 = vmatprep.subr.mxu0 0.0
    %491 = vmatpush1.msra.mxu0 %v52
    %492 = vmatprep.subr.mxu0 0.0
    %493 = vmatpush1.msra.mxu0 0.0
    %494 = vmatprep.subr.mxu0 0.0
    %495 = vmatpush1.msra.mxu0 0.0
    %496 = vmatprep.subr.mxu0 0.0
    %497 = vmatpush1.msra.mxu0 0.0
    %498 = vmatprep.subr.mxu0 0.0
    %499 = vmatpush1.msra.mxu0 0.0
    %500 = vmatprep.subr.mxu0 0.0
    %501 = vmatpush1.msra.mxu0 0.0
    %502 = vmatprep.subr.mxu0 0.0
    %503 = vmatpush1.msra.mxu0 0.0
    %504 = vmatprep.subr.mxu0 0.0
    %505 = vmatpush1.msra.mxu0 0.0
    %506 = vmatprep.subr.mxu0 0.0
    %507 = vmatpush1.msra.mxu0 0.0
    %508 = vmatprep.subr.mxu0 0.0
    %509 = vmatpush1.msra.mxu0 0.0
    %510 = vmatprep.subr.mxu0 0.0
    %511 = vmatpush1.msra.mxu0 0.0
    %512 = vmatprep.subr.mxu0 0.0
    %513 = vmatpush1.msra.mxu0 0.0
    %514 = vmatprep.subr.mxu0 0.0
    %515 = vmatpush1.msra.mxu0 0.0
    %516 = vmatprep.subr.mxu0 0.0
    %517 = vmatpush1.msra.mxu0 0.0
    %518 = vmatprep.subr.mxu0 0.0
    %519 = vmatpush1.msra.mxu0 0.0
    %520 = vmatprep.subr.mxu0 0.0
    %521 = vmatpush1.msra.mxu0 0.0
    %522 = vmatprep.subr.mxu0 0.0
    %523 = vmatpush1.msra.mxu0 0.0
    %524 = vmatprep.subr.mxu0 0.0
    %525 = vmatpush1.msra.mxu0 0.0
    %526 = vmatprep.subr.mxu0 0.0
    %527 = vmatpush1.msra.mxu0 0.0
    %528 = vmatprep.subr.mxu0 0.0
    %529 = vmatpush1.msra.mxu0 0.0
    %530 = vmatprep.subr.mxu0 0.0
    %531 = vmatpush1.msra.mxu0 0.0
    %532 = vmatprep.subr.mxu0 0.0
    %533 = vmatpush1.msra.mxu0 0.0
    %534 = vmatprep.subr.mxu0 0.0
    %535 = vmatpush1.msra.mxu0 0.0
    %536 = vmatprep.subr.mxu0 0.0
    %537 = vmatpush1.msra.mxu0 0.0
    %538 = vmatprep.subr.mxu0 0.0
    %539 = vmatpush1.msra.mxu0 0.0
    %540 = vmatprep.subr.mxu0 0.0
    %541 = vmatpush1.msra.mxu0 0.0
    %542 = vmatprep.subr.mxu0 0.0
    %543 = vmatpush1.msra.mxu0 0.0
    %544 = vmatprep.subr.mxu0 0.0
    %545 = vmatpush1.msra.mxu0 0.0
    %546 = vmatprep.subr.mxu0 0.0
    %547 = vmatpush1.msra.mxu0 0.0
    %548 = vmatprep.mubr.f32.mxu0 0.0
    %549 = vmatmul.mubr.f32.gmra.mrb[0].mxu0 %v482
    %v550 = vpop.f32.mrb[0].mxu0
    %v551 = vadd.f32 0.0, %v550
    %v552 = vpop.f32.mrb[0].mxu0
    %553 = vdwg.mxu0
    %v554 = vadd.f32 %v481, %v551
    %v555 = vxor.u32 %v554, 2147483648
    %v556 = vmul.f32 %v555, 1.442695
    %v557 = vpow.pop %v556
    %v558 = vadd.f32 %v557, 1.0
    %v559 = vrcp.pop %v558
    %v560 = vmul.f32 1.0, %v559
    %v561 = vtanh.pop %v554
    %v562 = vmul.f32 %v560, %v467
    %564 = vrot.lane.b32.xlu0 %v561, 64
    %v565 = vpop.permute.xlu0 %564
    %v567 = vmul.f32 %v560, %v565
    %569 = vrot.lane.b32.xlu0 %v567, 32
    %v570 = vpop.permute.xlu0 %569
    %v572 = vadd.f32 %v562, %v570
    %v573 = vtanh.pop %v572
    %575 = vrot.lane.b32.xlu0 %v573, 64
    %v576 = vpop.permute.xlu0 %575
    %v578 = vmul.f32 %v560, %v576
    %580 = vrot.lane.b32.xlu0 %v578, 32
    %v581 = vpop.permute.xlu0 %580
    %s583 = scalar_lea.vmem [#allocation7], 8
    %584 = vst.msk [vmem:[%s583] sm:$0x3] %vm163, %v581
    %s585 = scalar_lea.vmem [#allocation2], 10
    %v586 = vld [vmem:[%s585] sm:$0x3]
    %v587 = vsel %vm56, %v581, 0
    %589 = vmatprep.subr.mxu0 0.0
    %590 = vmatpush1.msra.mxu0 %v49
    %591 = vmatprep.subr.mxu0 0.0
    %592 = vmatpush1.msra.mxu0 %v50
    %593 = vmatprep.subr.mxu0 0.0
    %594 = vmatpush1.msra.mxu0 %v51
    %595 = vmatprep.subr.mxu0 0.0
    %596 = vmatpush1.msra.mxu0 %v52
    %597 = vmatprep.subr.mxu0 0.0
    %598 = vmatpush1.msra.mxu0 0.0
    %599 = vmatprep.subr.mxu0 0.0
    %600 = vmatpush1.msra.mxu0 0.0
    %601 = vmatprep.subr.mxu0 0.0
    %602 = vmatpush1.msra.mxu0 0.0
    %603 = vmatprep.subr.mxu0 0.0
    %604 = vmatpush1.msra.mxu0 0.0
    %605 = vmatprep.subr.mxu0 0.0
    %606 = vmatpush1.msra.mxu0 0.0
    %607 = vmatprep.subr.mxu0 0.0
    %608 = vmatpush1.msra.mxu0 0.0
    %609 = vmatprep.subr.mxu0 0.0
    %610 = vmatpush1.msra.mxu0 0.0
    %611 = vmatprep.subr.mxu0 0.0
    %612 = vmatpush1.msra.mxu0 0.0
    %613 = vmatprep.subr.mxu0 0.0
    %614 = vmatpush1.msra.mxu0 0.0
    %615 = vmatprep.subr.mxu0 0.0
    %616 = vmatpush1.msra.mxu0 0.0
    %617 = vmatprep.subr.mxu0 0.0
    %618 = vmatpush1.msra.mxu0 0.0
    %619 = vmatprep.subr.mxu0 0.0
    %620 = vmatpush1.msra.mxu0 0.0
    %621 = vmatprep.subr.mxu0 0.0
    %622 = vmatpush1.msra.mxu0 0.0
    %623 = vmatprep.subr.mxu0 0.0
    %624 = vmatpush1.msra.mxu0 0.0
    %625 = vmatprep.subr.mxu0 0.0
    %626 = vmatpush1.msra.mxu0 0.0
    %627 = vmatprep.subr.mxu0 0.0
    %628 = vmatpush1.msra.mxu0 0.0
    %629 = vmatprep.subr.mxu0 0.0
    %630 = vmatpush1.msra.mxu0 0.0
    %631 = vmatprep.subr.mxu0 0.0
    %632 = vmatpush1.msra.mxu0 0.0
    %633 = vmatprep.subr.mxu0 0.0
    %634 = vmatpush1.msra.mxu0 0.0
    %635 = vmatprep.subr.mxu0 0.0
    %636 = vmatpush1.msra.mxu0 0.0
    %637 = vmatprep.subr.mxu0 0.0
    %638 = vmatpush1.msra.mxu0 0.0
    %639 = vmatprep.subr.mxu0 0.0
    %640 = vmatpush1.msra.mxu0 0.0
    %641 = vmatprep.subr.mxu0 0.0
    %642 = vmatpush1.msra.mxu0 0.0
    %643 = vmatprep.subr.mxu0 0.0
    %644 = vmatpush1.msra.mxu0 0.0
    %645 = vmatprep.subr.mxu0 0.0
    %646 = vmatpush1.msra.mxu0 0.0
    %647 = vmatprep.subr.mxu0 0.0
    %648 = vmatpush1.msra.mxu0 0.0
    %649 = vmatprep.subr.mxu0 0.0
    %650 = vmatpush1.msra.mxu0 0.0
    %651 = vmatprep.subr.mxu0 0.0
    %652 = vmatpush1.msra.mxu0 0.0
    %653 = vmatprep.mubr.f32.mxu0 0.0
    %654 = vmatmul.mubr.f32.gmra.mrb[0].mxu0 %v587
    %v655 = vpop.f32.mrb[0].mxu0
    %v656 = vadd.f32 0.0, %v655
    %v657 = vpop.f32.mrb[0].mxu0
    %658 = vdwg.mxu0
    %v659 = vadd.f32 %v586, %v656
    %v660 = vxor.u32 %v659, 2147483648
    %v661 = vmul.f32 %v660, 1.442695
    %v662 = vpow.pop %v661
    %v663 = vadd.f32 %v662, 1.0
    %v664 = vrcp.pop %v663
    %v665 = vmul.f32 1.0, %v664
    %v666 = vtanh.pop %v659
    %v667 = vmul.f32 %v665, %v572
    %669 = vrot.lane.b32.xlu0 %v666, 64
    %v670 = vpop.permute.xlu0 %669
    %v672 = vmul.f32 %v665, %v670
    %674 = vrot.lane.b32.xlu0 %v672, 32
    %v675 = vpop.permute.xlu0 %674
    %v677 = vadd.f32 %v667, %v675
    %v678 = vtanh.pop %v677
    %680 = vrot.lane.b32.xlu0 %v678, 64
    %v681 = vpop.permute.xlu0 %680
    %v683 = vmul.f32 %v665, %v681
    %685 = vrot.lane.b32.xlu0 %v683, 32
    %v686 = vpop.permute.xlu0 %685
    %s688 = scalar_lea.vmem [#allocation7], 10
    %689 = vst.msk [vmem:[%s688] sm:$0x3] %vm163, %v686
    %s690 = scalar_lea.vmem [#allocation2], 12
    %v691 = vld [vmem:[%s690] sm:$0x3]
    %v692 = vsel %vm56, %v686, 0
    %694 = vmatprep.subr.mxu0 0.0
    %695 = vmatpush1.msra.mxu0 %v49
    %696 = vmatprep.subr.mxu0 0.0
    %697 = vmatpush1.msra.mxu0 %v50
    %698 = vmatprep.subr.mxu0 0.0
    %699 = vmatpush1.msra.mxu0 %v51
    %700 = vmatprep.subr.mxu0 0.0
    %701 = vmatpush1.msra.mxu0 %v52
    %702 = vmatprep.subr.mxu0 0.0
    %703 = vmatpush1.msra.mxu0 0.0
    %704 = vmatprep.subr.mxu0 0.0
    %705 = vmatpush1.msra.mxu0 0.0
    %706 = vmatprep.subr.mxu0 0.0
    %707 = vmatpush1.msra.mxu0 0.0
    %708 = vmatprep.subr.mxu0 0.0
    %709 = vmatpush1.msra.mxu0 0.0
    %710 = vmatprep.subr.mxu0 0.0
    %711 = vmatpush1.msra.mxu0 0.0
    %712 = vmatprep.subr.mxu0 0.0
    %713 = vmatpush1.msra.mxu0 0.0
    %714 = vmatprep.subr.mxu0 0.0
    %715 = vmatpush1.msra.mxu0 0.0
    %716 = vmatprep.subr.mxu0 0.0
    %717 = vmatpush1.msra.mxu0 0.0
    %718 = vmatprep.subr.mxu0 0.0
    %719 = vmatpush1.msra.mxu0 0.0
    %720 = vmatprep.subr.mxu0 0.0
    %721 = vmatpush1.msra.mxu0 0.0
    %722 = vmatprep.subr.mxu0 0.0
    %723 = vmatpush1.msra.mxu0 0.0
    %724 = vmatprep.subr.mxu0 0.0
    %725 = vmatpush1.msra.mxu0 0.0
    %726 = vmatprep.subr.mxu0 0.0
    %727 = vmatpush1.msra.mxu0 0.0
    %728 = vmatprep.subr.mxu0 0.0
    %729 = vmatpush1.msra.mxu0 0.0
    %730 = vmatprep.subr.mxu0 0.0
    %731 = vmatpush1.msra.mxu0 0.0
    %732 = vmatprep.subr.mxu0 0.0
    %733 = vmatpush1.msra.mxu0 0.0
    %734 = vmatprep.subr.mxu0 0.0
    %735 = vmatpush1.msra.mxu0 0.0
    %736 = vmatprep.subr.mxu0 0.0
    %737 = vmatpush1.msra.mxu0 0.0
    %738 = vmatprep.subr.mxu0 0.0
    %739 = vmatpush1.msra.mxu0 0.0
    %740 = vmatprep.subr.mxu0 0.0
    %741 = vmatpush1.msra.mxu0 0.0
    %742 = vmatprep.subr.mxu0 0.0
    %743 = vmatpush1.msra.mxu0 0.0
    %744 = vmatprep.subr.mxu0 0.0
    %745 = vmatpush1.msra.mxu0 0.0
    %746 = vmatprep.subr.mxu0 0.0
    %747 = vmatpush1.msra.mxu0 0.0
    %748 = vmatprep.subr.mxu0 0.0
    %749 = vmatpush1.msra.mxu0 0.0
    %750 = vmatprep.subr.mxu0 0.0
    %751 = vmatpush1.msra.mxu0 0.0
    %752 = vmatprep.subr.mxu0 0.0
    %753 = vmatpush1.msra.mxu0 0.0
    %754 = vmatprep.subr.mxu0 0.0
    %755 = vmatpush1.msra.mxu0 0.0
    %756 = vmatprep.subr.mxu0 0.0
    %757 = vmatpush1.msra.mxu0 0.0
    %758 = vmatprep.mubr.f32.mxu0 0.0
    %759 = vmatmul.mubr.f32.gmra.mrb[0].mxu0 %v692
    %v760 = vpop.f32.mrb[0].mxu0
    %v761 = vadd.f32 0.0, %v760
    %v762 = vpop.f32.mrb[0].mxu0
    %763 = vdwg.mxu0
    %v764 = vadd.f32 %v691, %v761
    %v765 = vxor.u32 %v764, 2147483648
    %v766 = vmul.f32 %v765, 1.442695
    %v767 = vpow.pop %v766
    %v768 = vadd.f32 %v767, 1.0
    %v769 = vrcp.pop %v768
    %v770 = vmul.f32 1.0, %v769
    %v771 = vtanh.pop %v764
    %v772 = vmul.f32 %v770, %v677
    %774 = vrot.lane.b32.xlu0 %v771, 64
    %v775 = vpop.permute.xlu0 %774
    %v777 = vmul.f32 %v770, %v775
    %779 = vrot.lane.b32.xlu0 %v777, 32
    %v780 = vpop.permute.xlu0 %779
    %v782 = vadd.f32 %v772, %v780
    %v783 = vtanh.pop %v782
    %785 = vrot.lane.b32.xlu0 %v783, 64
    %v786 = vpop.permute.xlu0 %785
    %v788 = vmul.f32 %v770, %v786
    %790 = vrot.lane.b32.xlu0 %v788, 32
    %v791 = vpop.permute.xlu0 %790
    %s793 = scalar_lea.vmem [#allocation7], 12
    %794 = vst.msk [vmem:[%s793] sm:$0x3] %vm163, %v791
    %s795 = scalar_lea.vmem [#allocation2], 14
    %v796 = vld [vmem:[%s795] sm:$0x3]
    %v797 = vsel %vm56, %v791, 0
    %799 = vmatprep.subr.mxu0 0.0
    %800 = vmatpush1.msra.mxu0 %v49
    %801 = vmatprep.subr.mxu0 0.0
    %802 = vmatpush1.msra.mxu0 %v50
    %803 = vmatprep.subr.mxu0 0.0
    %804 = vmatpush1.msra.mxu0 %v51
    %805 = vmatprep.subr.mxu0 0.0
    %806 = vmatpush1.msra.mxu0 %v52
    %807 = vmatprep.subr.mxu0 0.0
    %808 = vmatpush1.msra.mxu0 0.0
    %809 = vmatprep.subr.mxu0 0.0
    %810 = vmatpush1.msra.mxu0 0.0
    %811 = vmatprep.subr.mxu0 0.0
    %812 = vmatpush1.msra.mxu0 0.0
    %813 = vmatprep.subr.mxu0 0.0
    %814 = vmatpush1.msra.mxu0 0.0
    %815 = vmatprep.subr.mxu0 0.0
    %816 = vmatpush1.msra.mxu0 0.0
    %817 = vmatprep.subr.mxu0 0.0
    %818 = vmatpush1.msra.mxu0 0.0
    %819 = vmatprep.subr.mxu0 0.0
    %820 = vmatpush1.msra.mxu0 0.0
    %821 = vmatprep.subr.mxu0 0.0
    %822 = vmatpush1.msra.mxu0 0.0
    %823 = vmatprep.subr.mxu0 0.0
    %824 = vmatpush1.msra.mxu0 0.0
    %825 = vmatprep.subr.mxu0 0.0
    %826 = vmatpush1.msra.mxu0 0.0
    %827 = vmatprep.subr.mxu0 0.0
    %828 = vmatpush1.msra.mxu0 0.0
    %829 = vmatprep.subr.mxu0 0.0
    %830 = vmatpush1.msra.mxu0 0.0
    %831 = vmatprep.subr.mxu0 0.0
    %832 = vmatpush1.msra.mxu0 0.0
    %833 = vmatprep.subr.mxu0 0.0
    %834 = vmatpush1.msra.mxu0 0.0
    %835 = vmatprep.subr.mxu0 0.0
    %836 = vmatpush1.msra.mxu0 0.0
    %837 = vmatprep.subr.mxu0 0.0
    %838 = vmatpush1.msra.mxu0 0.0
    %839 = vmatprep.subr.mxu0 0.0
    %840 = vmatpush1.msra.mxu0 0.0
    %841 = vmatprep.subr.mxu0 0.0
    %842 = vmatpush1.msra.mxu0 0.0
    %843 = vmatprep.subr.mxu0 0.0
    %844 = vmatpush1.msra.mxu0 0.0
    %845 = vmatprep.subr.mxu0 0.0
    %846 = vmatpush1.msra.mxu0 0.0
    %847 = vmatprep.subr.mxu0 0.0
    %848 = vmatpush1.msra.mxu0 0.0
    %849 = vmatprep.subr.mxu0 0.0
    %850 = vmatpush1.msra.mxu0 0.0
    %851 = vmatprep.subr.mxu0 0.0
    %852 = vmatpush1.msra.mxu0 0.0
    %853 = vmatprep.subr.mxu0 0.0
    %854 = vmatpush1.msra.mxu0 0.0
    %855 = vmatprep.subr.mxu0 0.0
    %856 = vmatpush1.msra.mxu0 0.0
    %857 = vmatprep.subr.mxu0 0.0
    %858 = vmatpush1.msra.mxu0 0.0
    %859 = vmatprep.subr.mxu0 0.0
    %860 = vmatpush1.msra.mxu0 0.0
    %861 = vmatprep.subr.mxu0 0.0
    %862 = vmatpush1.msra.mxu0 0.0
    %863 = vmatprep.mubr.f32.mxu0 0.0
    %864 = vmatmul.mubr.f32.gmra.mrb[0].mxu0 %v797
    %v865 = vpop.f32.mrb[0].mxu0
    %v866 = vadd.f32 0.0, %v865
    %v867 = vpop.f32.mrb[0].mxu0
    %868 = vdwg.mxu0
    %v869 = vadd.f32 %v796, %v866
    %v870 = vxor.u32 %v869, 2147483648
    %v871 = vmul.f32 %v870, 1.442695
    %v872 = vpow.pop %v871
    %v873 = vadd.f32 %v872, 1.0
    %v874 = vrcp.pop %v873
    %v875 = vmul.f32 1.0, %v874
    %v876 = vtanh.pop %v869
    %v877 = vmul.f32 %v875, %v782
    %879 = vrot.lane.b32.xlu0 %v876, 64
    %v880 = vpop.permute.xlu0 %879
    %v882 = vmul.f32 %v875, %v880
    %884 = vrot.lane.b32.xlu0 %v882, 32
    %v885 = vpop.permute.xlu0 %884
    %v887 = vadd.f32 %v877, %v885
    %v888 = vtanh.pop %v887
    %890 = vrot.lane.b32.xlu0 %v888, 64
    %v891 = vpop.permute.xlu0 %890
    %v893 = vmul.f32 %v875, %v891
    %895 = vrot.lane.b32.xlu0 %v893, 32
    %v896 = vpop.permute.xlu0 %895
    %s898 = scalar_lea.vmem [#allocation7], 14
    %899 = vst.msk [vmem:[%s898] sm:$0x3] %vm163, %v896
    %901 = vrot.lane.b32.xlu0 %v887, 96
    %v902 = vpop.permute.xlu0 %901
    %904 = vst.msk [vmem:[#allocation8] sm:$0x3] %vm163, %v902
    // Predicated region
    $region26: #{tpu_custom_call.1} parent=1 // pred_check
      _
    $region27: #{tpu_custom_call.1} parent=1 // pred_check_branch
      %906 = sbr.rel (0) target = $region29
    $region28: #{tpu_custom_call.1} parent=1 // pred_region
      %s908 = ssub.s32 256, 256
      %909 = vsyncadd [#allocation4], %s908
      %s910 = sshll.u32 [#allocation7], 4
      %s911 = int_to_ptr.vmem [resolvable:$true] %s910
      %916 = dma.vmem_to_hbm [thread:$0]  %s911, 256, %s4, [#allocation4], 32, 32, 2
    $region29: #{tpu_custom_call.1} parent=1 // pred_fallthru
      _
    // Predicated region
    $region30: #{tpu_custom_call.1} parent=1 // pred_check
      _
    $region31: #{tpu_custom_call.1} parent=1 // pred_check_branch
      %918 = sbr.rel (0) target = $region33
    $region32: #{tpu_custom_call.1} parent=1 // pred_region
      %s920 = ssub.s32 32, 32
      %921 = vsyncadd [#allocation9], %s920
      %s923 = sshll.u32 [#allocation8], 4
      %s924 = int_to_ptr.vmem [resolvable:$true] %s923
      %926 = dma.vmem_to_hbm [thread:$0]  %s924, 32, %s5, [#allocation9]
    $region33: #{tpu_custom_call.1} parent=1 // pred_fallthru
      _
    // Predicated region
    $region34: #{tpu_custom_call.1} parent=1 // pred_check
      _
    $region35: #{tpu_custom_call.1} parent=1 // pred_check_branch
      %928 = sbr.rel (0) target = $region37
    $region36: #{tpu_custom_call.1} parent=1 // pred_region
      %929 = dma.done [#allocation4], 256
    $region37: #{tpu_custom_call.1} parent=1 // pred_fallthru
      _
    // Predicated region
    $region38: #{tpu_custom_call.1} parent=1 // pred_check
      _
    $region39: #{tpu_custom_call.1} parent=1 // pred_check_branch
      %931 = sbr.rel (0) target = $region41
    $region40: #{tpu_custom_call.1} parent=1 // pred_region
      %932 = dma.done [#allocation9], 32
    $region41: #{tpu_custom_call.1} parent=1 // pred_fallthru
      _
    %933 = vsyncpa [#allocation3], 1
    %934 = vsyncpa [#allocation6], 1
    %935 = vsyncpa [#allocation4], 1
    %936 = vsyncpa [#allocation9], 1

</llo_original>
